<compile_context>
chip_gen: v6e
topology: v6e:2x2x1
jax: 0.10.0
libtpu: 0.0.40
codegen_flags: <defaults>
</compile_context>

<pallas_src>
import math
import functools

import jax
import jax.numpy as jnp
from jax.experimental import pallas as pl
from jax.experimental.pallas import tpu as pltpu


def _pe_add_kernel(pe_ref, x_ref, o_ref):
    # pe_ref: (1, tc), x_ref/o_ref: (B, tc) -- pe broadcasts over batch rows.
    o_ref[...] = x_ref[...] + pe_ref[...]


def _pe_add_dropout_kernel(pe_ref, x_ref, bits_ref, o_ref, *, keep_threshold,
                           inv_keep_rate):
    y = x_ref[...] + pe_ref[...]
    # Integer-threshold compare: keep with probability (1 - p), no u32->f32
    # conversion, no float compare.
    keep = bits_ref[...] < jnp.uint32(keep_threshold)
    scale = jnp.asarray(inv_keep_rate, y.dtype)
    o_ref[...] = jnp.where(keep, y * scale, jnp.zeros_like(y))


def _pe_table(seq_len, d_model, dtype):
    """Sinusoidal PE exactly as the PyTorch buffer construction."""
    position = jnp.arange(seq_len, dtype=jnp.float32)[:, None]          # (S, 1)
    div_term = jnp.exp(
        jnp.arange(0, d_model, 2, dtype=jnp.float32)
        * (-(math.log(10000.0) / d_model)))                              # (D/2,)
    ang = position * div_term                                            # (S, D/2)
    pe = jnp.zeros((seq_len, d_model), jnp.float32)
    pe = pe.at[:, 0::2].set(jnp.sin(ang))
    pe = pe.at[:, 1::2].set(jnp.cos(ang))
    return pe.astype(dtype)


def _pick_chunk(batch, flat, itemsize):
    """Lane-dense chunk along the flattened S*D axis, ~<=2 MiB per x block."""
    if flat <= 256:
        return flat
    target_bytes = 2 * 1024 * 1024
    tc = max(128, min(flat, target_bytes // max(1, batch * itemsize)))
    tc = (tc // 128) * 128
    if tc >= flat:
        return flat
    return max(128, tc)


def positional_encoding(x, *, p=0.2, training=False, key=None):
    """x: (B, S, D).  Returns dropout(x + PE[:, :S, :]) with PyTorch semantics."""
    B, S, D = x.shape
    assert D % 2 == 0, "d_model must be even (PyTorch construction assumes it)"

    flat = S * D
    pe_flat = _pe_table(S, D, x.dtype).reshape(1, flat)   # batch-invariant, built once
    x2 = x.reshape(B, flat)                               # lane-dense 2-D view

    tc = _pick_chunk(B, flat, x.dtype.itemsize)
    n_chunks = pl.cdiv(flat, tc)

    in_specs = [
        pl.BlockSpec((1, tc), lambda c: (0, c)),   # PE chunk (broadcast over batch)
        pl.BlockSpec((B, tc), lambda c: (0, c)),   # x chunk
    ]
    operands = [pe_flat, x2]

    use_dropout = bool(training) and float(p) > 0.0
    if use_dropout:
        if key is None:
            key = jax.random.PRNGKey(0)
        bits = jax.random.bits(key, (B, flat), dtype=jnp.uint32)
        in_specs.append(pl.BlockSpec((B, tc), lambda c: (0, c)))
        operands.append(bits)
        keep_threshold = min(int(round((1.0 - float(p)) * (2 ** 32))), 2 ** 32 - 1)
        kernel = functools.partial(
            _pe_add_dropout_kernel,
            keep_threshold=keep_threshold,
            inv_keep_rate=1.0 / (1.0 - float(p)),
        )
    else:
        kernel = _pe_add_kernel

    out2 = pl.pallas_call(
        kernel,
        out_shape=jax.ShapeDtypeStruct((B, flat), x.dtype),
        grid=(n_chunks,),
        in_specs=in_specs,
        out_specs=pl.BlockSpec((B, tc), lambda c: (0, c)),
        input_output_aliases={1: 0},   # x aliases the output (in-place add)
        compiler_params=pltpu.CompilerParams(
            dimension_semantics=("parallel",)),
    )(*operands)

    return out2.reshape(B, S, D)


def _reference(x):
    """Pure-JAX reference mirroring the PyTorch module in eval mode."""
    B, S, D = x.shape
    return x + _pe_table(S, D, jnp.float32)[None, :, :]


if __name__ == "__main__":
    B, S, D = 2, 8, 32   # small shapes; D=32 stands in for the default d_model=768
    key = jax.random.PRNGKey(0)
    x = jax.random.normal(key, (B, S, D), dtype=jnp.float32)

    ref = _reference(x)

    # Eval-mode forward (dropout = identity): matches PyTorch exactly.
    out = positional_encoding(x, p=0.2, training=False)
    out = jax.block_until_ready(out)
    assert out.shape == (B, S, D)
    assert jnp.allclose(out, ref, atol=1e-5, rtol=1e-5), "eval-mode mismatch vs reference"

    # Training-mode forward (dropout with host-generated bits, in-kernel mask).
    out_tr = positional_encoding(x, p=0.2, training=True, key=jax.random.PRNGKey(123))
    out_tr = jax.block_until_ready(out_tr)
    mask = out_tr != 0.0
    # Kept elements equal ref / (1 - p); dropped elements are exactly zero.
    assert jnp.allclose(jnp.where(mask, out_tr, 0.0),
                        jnp.where(mask, ref / 0.8, 0.0), atol=1e-4, rtol=1e-4)
    assert bool(jnp.any(mask)) and bool(jnp.any(~mask))

    print("KERNEL_OK")
</pallas_src>

<mosaic_0001>
module attributes {stable_mosaic.version = 11 : i64} {
  func.func @_pe_add_kernel(%arg0: i32, %arg1: memref<1x256xf32, #tpu.memory_space<vmem>>, %arg2: memref<2x256xf32, #tpu.memory_space<vmem>>, %arg3: memref<2x256xf32, #tpu.memory_space<vmem>>) attributes {dimension_semantics = [#tpu.dimension_semantics<parallel>], iteration_bounds = array<i64: 1>, scalar_prefetch = 0 : i64, scratch_operands = 0 : i64, tpu.core_type = #tpu.core_type<tc>, window_params = [{transform_indices = @transform_0, window_bounds = array<i64: 1, 256>}, {transform_indices = @transform_1, window_bounds = array<i64: 2, 256>}, {transform_indices = @transform_2, window_bounds = array<i64: 2, 256>}]} {
    %c0 = arith.constant 0 : index
    %c0_0 = arith.constant 0 : index
    %0 = vector.load %arg2[%c0, %c0_0] : memref<2x256xf32, #tpu.memory_space<vmem>>, vector<2x256xf32>
    %c0_1 = arith.constant 0 : index
    %c0_2 = arith.constant 0 : index
    %1 = vector.load %arg1[%c0_1, %c0_2] : memref<1x256xf32, #tpu.memory_space<vmem>>, vector<1x256xf32>
    %2 = vector.broadcast %1 : vector<1x256xf32> to vector<2x256xf32>
    %3 = arith.addf %0, %2 : vector<2x256xf32>
    %c0_3 = arith.constant 0 : index
    %c0_4 = arith.constant 0 : index
    %4 = vector.load %arg3[%c0_3, %c0_4] : memref<2x256xf32, #tpu.memory_space<vmem>>, vector<2x256xf32>
    tpu.vector_store %arg3[%c0_3, %c0_4], %3 {strides = array<i32>} : memref<2x256xf32, #tpu.memory_space<vmem>>, vector<2x256xf32>,
    return
  }
  func.func @transform_0(%arg0: i32) -> (i32, i32) {
    %c0_i32 = arith.constant 0 : i32
    %c0_i32_0 = arith.constant 0 : i32
    return %c0_i32, %arg0 : i32, i32
  }
  func.func @transform_1(%arg0: i32) -> (i32, i32) {
    %c0_i32 = arith.constant 0 : i32
    %c0_i32_0 = arith.constant 0 : i32
    return %c0_i32, %arg0 : i32, i32
  }
  func.func @transform_2(%arg0: i32) -> (i32, i32) {
    %c0_i32 = arith.constant 0 : i32
    %c0_i32_0 = arith.constant 0 : i32
    return %c0_i32, %arg0 : i32, i32
  }
}

</mosaic_0001>

<llo_original>
// kernel: tpu_custom_call.1
$region0: #{tpu_custom_call.1}
  #allocation0 [shape = 'u32[]', space=smem, size = 0x4, offset = 0x4, fixed_abs, tag = 'smem constant byte address 0x4 - core index']
  #allocation1 [shape = 'u32[144,128]{1,0:T(1,128)}', space=vmem, size = 0x12000, scoped, tag = 'internal scratch']
  %s0 = inlined_call_operand.vmem [shape: f32[1,256], index: 0, kind: input, shape index: {}]
  %s1 = inlined_call_operand.hbm [shape: f32[2,256], index: 1, kind: input, shape index: {}, may-alias: {1,2}]
  %s2 = inlined_call_operand.hbm [shape: f32[2,256], index: 2, kind: output, shape index: {}, may-alias: {1,2}]
  %s3 = sld [smem:[#allocation0]]
  $region22: #{tpu_custom_call.1} parent=0
    _
  %s5 = ssub.s32 1, %s3
  %s6 = scalar_select 0, %s5, %s3
  $region1: #{tpu_custom_call.1} parent=0
    #allocation2 [shape = 'u8[2048]{0}', space=vmem, size = 0x800, scoped, tag = 'input window, operand 1, single buffered']
    #allocation3 [shape = 's32[1]{0}', space=sflag, size = 0x4, scoped, tag = 'scoped memory for tpu_custom_call.1']
    #allocation4 [shape = 's32[1]{0}', space=sflag, size = 0x4, scoped, tag = 'scoped memory for tpu_custom_call.1']
    #allocation5 [shape = 'u8[2048]{0}', space=vmem, size = 0x800, scoped, tag = 'output window, operand 0, single buffered']
    %7 = vsyncpa [#allocation3], 0
    %8 = vsyncpa [#allocation4], 0
    // Predicated region
    $region2: #{tpu_custom_call.1} parent=1 // pred_check
      _
    $region3: #{tpu_custom_call.1} parent=1 // pred_check_branch
      %10 = sbr.rel (0) target = $region5
    $region4: #{tpu_custom_call.1} parent=1 // pred_region
      _
    $region5: #{tpu_custom_call.1} parent=1 // pred_fallthru
      _
    // Predicated region
    $region6: #{tpu_custom_call.1} parent=1 // pred_check
      _
    $region7: #{tpu_custom_call.1} parent=1 // pred_check_branch
      %12 = sbr.rel (0) target = $region9
    $region8: #{tpu_custom_call.1} parent=1 // pred_region
      %s14 = ssub.s32 64, 64
      %15 = vsyncadd [#allocation3], %s14
      %s17 = sshll.u32 [#allocation2], 4
      %s18 = int_to_ptr.vmem [resolvable:$true] %s17
      %20 = dma.hbm_to_vmem [thread:$0]  %s1, 64, %s18, [#allocation3]
    $region9: #{tpu_custom_call.1} parent=1 // pred_fallthru
      _
    // Predicated region
    $region10: #{tpu_custom_call.1} parent=1 // pred_check
      _
    $region11: #{tpu_custom_call.1} parent=1 // pred_check_branch
      %22 = sbr.rel (0) target = $region13
    $region12: #{tpu_custom_call.1} parent=1 // pred_region
      %23 = dma.done [#allocation3], 64
    $region13: #{tpu_custom_call.1} parent=1 // pred_fallthru
      _
    %v24 = vld [vmem:[#allocation2] sm:$0xf]
    %v25 = vld [vmem:[%s0] sm:$0x3]
    %v27 = vlaneseq
    %v28 = vshrl.u32 %v27, 7
    %v29 = vsub.s32 0, %v28
    %v30 = vrot.slane %v25, %v29
    %v31 = vlaneseq
    %v32 = vshrl.u32 %v31, 7
    %v33 = vsub.s32 1, %v32
    %v34 = vrot.slane %v25, %v33
    %v35 = vcombine.low %v30, %v34
    %v37 = vunpack.c.l.s4 1983009808
    %v38 = vunpack.c.0.s8 %v37
    %v39 = vlaneseq
    %v40 = vshrl.u32 %v39, 7
    %v41 = vsub.s32 %v38, %v40
    %v42 = vrot.slane %v35, %v41
    %v44 = vadd.f32 %v24, %v42
    %45 = vst [vmem:[#allocation5] sm:$0xf] %v44
    // Predicated region
    $region14: #{tpu_custom_call.1} parent=1 // pred_check
      _
    $region15: #{tpu_custom_call.1} parent=1 // pred_check_branch
      %47 = sbr.rel (0) target = $region17
    $region16: #{tpu_custom_call.1} parent=1 // pred_region
      %s49 = ssub.s32 64, 64
      %50 = vsyncadd [#allocation4], %s49
      %s52 = sshll.u32 [#allocation5], 4
      %s53 = int_to_ptr.vmem [resolvable:$true] %s52
      %55 = dma.vmem_to_hbm [thread:$0]  %s53, 64, %s2, [#allocation4]
    $region17: #{tpu_custom_call.1} parent=1 // pred_fallthru
      _
    // Predicated region
    $region18: #{tpu_custom_call.1} parent=1 // pred_check
      _
    $region19: #{tpu_custom_call.1} parent=1 // pred_check_branch
      %57 = sbr.rel (0) target = $region21
    $region20: #{tpu_custom_call.1} parent=1 // pred_region
      %58 = dma.done [#allocation4], 64
    $region21: #{tpu_custom_call.1} parent=1 // pred_fallthru
      _
    %59 = vsyncpa [#allocation3], 1
    %60 = vsyncpa [#allocation4], 1

</llo_original>
